<compile_context>
chip_gen: v6e
topology: v6e:2x2x1
jax: 0.10.0
libtpu: 0.0.40
codegen_flags: <defaults>
</compile_context>

<pallas_src>
import jax
import jax.numpy as jnp
from jax.experimental import pallas as pl
from jax.experimental.pallas import tpu as pltpu


def _din_attention_kernel(q_ref, ub_ref, keep_ref,
                          wq_ref, wum_ref, b1_ref, w23_ref, b23_ref,
                          o_ref):
    # Per-grid-step views (one batch block):
    #   q_ref:   (Bb, E)     ub_ref: (Bb, T, E)   keep_ref: (Bb, T)
    #   wq_ref:  (E, H)      wum_ref: (2E, H)     b1_ref: (1, H)
    #   w23_ref: (1, H)      b23_ref: (1, 1)      o_ref:  (Bb, E)
    Bb, T, E = ub_ref.shape
    H = wq_ref.shape[1]

    q = q_ref[...]                                        # (Bb, E)
    ub = ub_ref[...]                                      # (Bb, T, E)

    # Query-side contribution of W1 (+ bias): computed once per sample,
    # broadcast over T below.
    hq = jnp.dot(q, wq_ref[...],
                 preferred_element_type=jnp.float32) + b1_ref[...]      # (Bb, H)

    # Behaviour + cross-term contributions in ONE MXU pass over the slab:
    #   [ub, q*ub]  (Bb*T, 2E)  @  wum (2E, H)
    x_um = jnp.concatenate([ub, q[:, None, :] * ub], axis=-1)           # (Bb, T, 2E)
    h_um = jnp.dot(x_um.reshape(Bb * T, 2 * E), wum_ref[...],
                   preferred_element_type=jnp.float32)                  # (Bb*T, H)

    h1 = jnp.maximum(hq[:, None, :] + h_um.reshape(Bb, T, H), 0.0)      # ReLU

    # Folded Linear(H,16) -> Linear(16,1), done on VPU (mult) + XLU (lane
    # reduce) so the MXU only runs the big pass above.
    score = jnp.sum(h1 * w23_ref[...], axis=-1, keepdims=True)          # (Bb, T, 1)
    score = score + b23_ref[...]

    # masked_fill(mask, 0) as a multiply; weighted sum over T (VPU + sublane
    # reduce) replaces the per-sample (1,T)@(T,E) matmul.
    ws = score * keep_ref[...].reshape(Bb, T, 1)                        # (Bb, T, 1)
    o_ref[...] = jnp.sum(ws * ub, axis=1)                               # (Bb, E)


def attention_sequence_pooling(query_ad, user_behavior, mask, params,
                               block_batch=256):
    """Pallas implementation of AttentionSequencePoolingLayer.forward.

    query_ad: (B,1,E) f32, user_behavior: (B,T,E) f32, mask: (B,T) bool or None
    (True => masked out).  params = (w1, b1, w2, b2, w3, b3) with weights laid
    out (in, out).  Returns (B,1,E) f32.
    """
    B, _, E = query_ad.shape
    T = user_behavior.shape[1]
    w1, b1, w2, b2, w3, b3 = params
    H = w1.shape[1]

    # --- algebraic parameter folding (wrapper-side, once) --------------------
    wq, wu, wd, wm = w1[0:E], w1[E:2 * E], w1[2 * E:3 * E], w1[3 * E:4 * E]
    wq_eff = wq + wd                                   # multiplies q
    wum = jnp.concatenate([wu - wd, wm], axis=0)       # multiplies [ub, q*ub]
    w23_row = (w2 @ w3).reshape(1, H)                  # folded fc1[-1] @ fc2
    b23 = b2 @ w3 + b3                                 # (1, 1)

    # --- activation layout prep ----------------------------------------------
    q2d = query_ad.reshape(B, E)
    if mask is None:
        keep = jnp.ones((B, T), jnp.float32)
    else:
        keep = 1.0 - mask.astype(jnp.float32)          # 1 = keep, 0 = masked

    # --- batch blocking --------------------------------------------------------
    if B <= block_batch:
        Bb, Bp = B, B
    else:
        Bb = block_batch                               # multiple of 8
        Bp = pl.cdiv(B, Bb) * Bb
    if Bp != B:
        pad = Bp - B
        q2d = jnp.pad(q2d, ((0, pad), (0, 0)))
        user_behavior = jnp.pad(user_behavior, ((0, pad), (0, 0), (0, 0)))
        keep = jnp.pad(keep, ((0, pad), (0, 0)))

    full = lambda a: pl.BlockSpec(a.shape, lambda b: (0,) * a.ndim)

    out2d = pl.pallas_call(
        _din_attention_kernel,
        out_shape=jax.ShapeDtypeStruct((Bp, E), jnp.float32),
        grid=(Bp // Bb,),
        in_specs=[
            pl.BlockSpec((Bb, E), lambda b: (b, 0)),           # query
            pl.BlockSpec((Bb, T, E), lambda b: (b, 0, 0)),     # user_behavior
            pl.BlockSpec((Bb, T), lambda b: (b, 0)),           # keep (1 - mask)
            full(wq_eff), full(wum), full(b1), full(w23_row), full(b23),
        ],
        out_specs=pl.BlockSpec((Bb, E), lambda b: (b, 0)),
        compiler_params=pltpu.CompilerParams(
            dimension_semantics=("parallel",),
            vmem_limit_bytes=32 * 1024 * 1024),
    )(q2d, user_behavior, keep, wq_eff, wum, b1, w23_row, b23)

    return out2d[:B].reshape(B, 1, E)


def init_params(key, embedding_dim=4, hidden_unit=(64, 16)):
    """Deterministic PyTorch-Linear-style init (uniform +/- 1/sqrt(fan_in)),
    stored (in, out)."""
    in_dim = 4 * embedding_dim
    dims = [in_dim, hidden_unit[0], hidden_unit[1], 1]
    params = []
    for i in range(3):
        key, kw, kb = jax.random.split(key, 3)
        bound = 1.0 / jnp.sqrt(dims[i])
        w = jax.random.uniform(kw, (dims[i], dims[i + 1]), jnp.float32, -bound, bound)
        b = jax.random.uniform(kb, (1, dims[i + 1]), jnp.float32, -bound, bound)
        params += [w, b]
    return tuple(params)


def reference_forward(query_ad, user_behavior, mask, params):
    """Pure-JAX reference mirroring the PyTorch module (unfolded)."""
    w1, b1, w2, b2, w3, b3 = params
    T = user_behavior.shape[1]
    queries = jnp.broadcast_to(query_ad, (query_ad.shape[0], T, query_ad.shape[2]))
    att_in = jnp.concatenate(
        [queries, user_behavior, queries - user_behavior, queries * user_behavior],
        axis=-1)
    h1 = jnp.maximum(att_in @ w1 + b1, 0.0)
    h2 = h1 @ w2 + b2
    score = h2 @ w3 + b3                       # (B, T, 1)
    score = jnp.swapaxes(score, 1, 2)          # (B, 1, T)
    if mask is not None:
        score = jnp.where(mask[:, None, :], 0.0, score)
    return score @ user_behavior               # (B, 1, E)


if __name__ == "__main__":
    B, T, E = 2, 8, 4
    key = jax.random.PRNGKey(0)
    kq, kub, km, kp, kq2, kub2, km2 = jax.random.split(key, 7)

    query_ad = jax.random.normal(kq, (B, 1, E), jnp.float32)
    user_behavior = jax.random.normal(kub, (B, T, E), jnp.float32)
    mask = jax.random.bernoulli(km, 0.25, (B, T))        # True => masked out
    params = init_params(kp, embedding_dim=E)

    out = attention_sequence_pooling(query_ad, user_behavior, mask, params)
    out = jax.block_until_ready(out)
    ref = reference_forward(query_ad, user_behavior, mask, params)
    assert out.shape == (B, 1, E)
    assert jnp.allclose(out, ref, atol=1e-4, rtol=1e-4), "mismatch (masked)"

    # No-mask path.
    out_nm = jax.block_until_ready(
        attention_sequence_pooling(query_ad, user_behavior, None, params))
    ref_nm = reference_forward(query_ad, user_behavior, None, params)
    assert jnp.allclose(out_nm, ref_nm, atol=1e-4, rtol=1e-4), "mismatch (no mask)"

    # Multi-block + batch-padding path (small block size forces grid > 1).
    B2 = 20
    q2 = jax.random.normal(kq2, (B2, 1, E), jnp.float32)
    ub2 = jax.random.normal(kub2, (B2, T, E), jnp.float32)
    m2 = jax.random.bernoulli(km2, 0.5, (B2, T))
    out2 = jax.block_until_ready(
        attention_sequence_pooling(q2, ub2, m2, params, block_batch=8))
    ref2 = reference_forward(q2, ub2, m2, params)
    assert jnp.allclose(out2, ref2, atol=1e-4, rtol=1e-4), "mismatch (blocked)"

    print("KERNEL_OK")
</pallas_src>

<mosaic_0001>
module attributes {stable_mosaic.version = 11 : i64} {
  func.func @_din_attention_kernel(%arg0: i32, %arg1: memref<2x4xf32, #tpu.memory_space<vmem>>, %arg2: memref<2x8x4xf32, #tpu.memory_space<vmem>>, %arg3: memref<2x8xf32, #tpu.memory_space<vmem>>, %arg4: memref<4x64xf32, #tpu.memory_space<vmem>>, %arg5: memref<8x64xf32, #tpu.memory_space<vmem>>, %arg6: memref<1x64xf32, #tpu.memory_space<vmem>>, %arg7: memref<1x64xf32, #tpu.memory_space<vmem>>, %arg8: memref<1x1xf32, #tpu.memory_space<vmem>>, %arg9: memref<2x4xf32, #tpu.memory_space<vmem>>) attributes {dimension_semantics = [#tpu.dimension_semantics<parallel>], iteration_bounds = array<i64: 1>, scalar_prefetch = 0 : i64, scratch_operands = 0 : i64, tpu.core_type = #tpu.core_type<tc>, window_params = [{transform_indices = @transform_0, window_bounds = array<i64: 2, 4>}, {transform_indices = @transform_1, window_bounds = array<i64: 2, 8, 4>}, {transform_indices = @transform_2, window_bounds = array<i64: 2, 8>}, {pipeline_mode = #tpu.pipeline_mode<synchronous>, transform_indices = @transform_3, window_bounds = array<i64: 4, 64>}, {pipeline_mode = #tpu.pipeline_mode<synchronous>, transform_indices = @transform_4, window_bounds = array<i64: 8, 64>}, {pipeline_mode = #tpu.pipeline_mode<synchronous>, transform_indices = @transform_5, window_bounds = array<i64: 1, 64>}, {pipeline_mode = #tpu.pipeline_mode<synchronous>, transform_indices = @transform_6, window_bounds = array<i64: 1, 64>}, {pipeline_mode = #tpu.pipeline_mode<synchronous>, transform_indices = @transform_7, window_bounds = array<i64: 1, 1>}, {transform_indices = @transform_8, window_bounds = array<i64: 2, 4>}]} {
    %c0 = arith.constant 0 : index
    %c0_0 = arith.constant 0 : index
    %0 = vector.load %arg1[%c0, %c0_0] : memref<2x4xf32, #tpu.memory_space<vmem>>, vector<2x4xf32>
    %c0_1 = arith.constant 0 : index
    %c0_2 = arith.constant 0 : index
    %c0_3 = arith.constant 0 : index
    %1 = vector.load %arg2[%c0_1, %c0_2, %c0_3] : memref<2x8x4xf32, #tpu.memory_space<vmem>>, vector<2x8x4xf32>
    %c0_4 = arith.constant 0 : index
    %c0_5 = arith.constant 0 : index
    %2 = vector.load %arg4[%c0_4, %c0_5] : memref<4x64xf32, #tpu.memory_space<vmem>>, vector<4x64xf32>
    %cst = arith.constant dense<0.000000e+00> : vector<2x64xf32>
    %3 = tpu.matmul %0, %2, %cst {dimension_numbers = #tpu.dot_dimension_numbers<[1], [0], [0], [1], [0, 0, 1, 1], [], []>} : vector<2x4xf32>, vector<4x64xf32>, vector<2x64xf32> -> vector<2x64xf32>
    %c0_6 = arith.constant 0 : index
    %c0_7 = arith.constant 0 : index
    %4 = vector.load %arg6[%c0_6, %c0_7] : memref<1x64xf32, #tpu.memory_space<vmem>>, vector<1x64xf32>
    %5 = vector.broadcast %4 : vector<1x64xf32> to vector<2x64xf32>
    %6 = arith.addf %3, %5 : vector<2x64xf32>
    %7 = vector.shape_cast %0 : vector<2x4xf32> to vector<2x1x4xf32>
    %8 = vector.broadcast %7 : vector<2x1x4xf32> to vector<2x8x4xf32>
    %9 = arith.mulf %8, %1 : vector<2x8x4xf32>
    %10 = tpu.concatenate %1, %9 in 2 : vector<2x8x4xf32>, vector<2x8x4xf32> -> vector<2x8x8xf32>
    %11 = vector.shape_cast %10 : vector<2x8x8xf32> to vector<16x8xf32>
    %c0_8 = arith.constant 0 : index
    %c0_9 = arith.constant 0 : index
    %12 = vector.load %arg5[%c0_8, %c0_9] : memref<8x64xf32, #tpu.memory_space<vmem>>, vector<8x64xf32>
    %cst_10 = arith.constant dense<0.000000e+00> : vector<16x64xf32>
    %13 = tpu.matmul %11, %12, %cst_10 {dimension_numbers = #tpu.dot_dimension_numbers<[1], [0], [0], [1], [0, 0, 1, 1], [], []>} : vector<16x8xf32>, vector<8x64xf32>, vector<16x64xf32> -> vector<16x64xf32>
    %14 = vector.shape_cast %6 : vector<2x64xf32> to vector<2x1x64xf32>
    %15 = vector.shape_cast %13 : vector<16x64xf32> to vector<2x8x64xf32>
    %16 = vector.broadcast %14 : vector<2x1x64xf32> to vector<2x8x64xf32>
    %17 = arith.addf %16, %15 : vector<2x8x64xf32>
    %cst_11 = arith.constant 0.000000e+00 : f32
    %18 = vector.broadcast %cst_11 : f32 to vector<2x8x64xf32>
    %19 = arith.maximumf %17, %18 : vector<2x8x64xf32>
    %c0_12 = arith.constant 0 : index
    %c0_13 = arith.constant 0 : index
    %20 = vector.load %arg7[%c0_12, %c0_13] : memref<1x64xf32, #tpu.memory_space<vmem>>, vector<1x64xf32>
    %21 = vector.shape_cast %20 : vector<1x64xf32> to vector<1x1x64xf32>
    %22 = vector.broadcast %21 : vector<1x1x64xf32> to vector<2x8x64xf32>
    %23 = arith.mulf %19, %22 : vector<2x8x64xf32>
    %cst_14 = arith.constant dense<0.000000e+00> : vector<2x8xf32>
    %24 = vector.multi_reduction <add>, %23, %cst_14 [2] : vector<2x8x64xf32> to vector<2x8xf32>
    %25 = vector.shape_cast %24 : vector<2x8xf32> to vector<2x8x1xf32>
    %c0_15 = arith.constant 0 : index
    %c0_16 = arith.constant 0 : index
    %26 = vector.load %arg8[%c0_15, %c0_16] : memref<1x1xf32, #tpu.memory_space<vmem>>, vector<1x1xf32>
    %27 = vector.shape_cast %26 : vector<1x1xf32> to vector<1x1x1xf32>
    %28 = vector.broadcast %27 : vector<1x1x1xf32> to vector<2x8x1xf32>
    %29 = arith.addf %25, %28 : vector<2x8x1xf32>
    %c0_17 = arith.constant 0 : index
    %c0_18 = arith.constant 0 : index
    %30 = vector.load %arg3[%c0_17, %c0_18] : memref<2x8xf32, #tpu.memory_space<vmem>>, vector<2x8xf32>
    %31 = vector.shape_cast %30 : vector<2x8xf32> to vector<2x8x1xf32>
    %32 = arith.mulf %29, %31 : vector<2x8x1xf32>
    %33 = vector.broadcast %32 : vector<2x8x1xf32> to vector<2x8x4xf32>
    %34 = arith.mulf %33, %1 : vector<2x8x4xf32>
    %cst_19 = arith.constant dense<0.000000e+00> : vector<2x4xf32>
    %35 = vector.multi_reduction <add>, %34, %cst_19 [1] : vector<2x8x4xf32> to vector<2x4xf32>
    %c0_20 = arith.constant 0 : index
    %c0_21 = arith.constant 0 : index
    %36 = vector.load %arg9[%c0_20, %c0_21] : memref<2x4xf32, #tpu.memory_space<vmem>>, vector<2x4xf32>
    tpu.vector_store %arg9[%c0_20, %c0_21], %35 {strides = array<i32>} : memref<2x4xf32, #tpu.memory_space<vmem>>, vector<2x4xf32>,
    return
  }
  func.func @transform_0(%arg0: i32) -> (i32, i32) {
    %c0_i32 = arith.constant 0 : i32
    %c0_i32_0 = arith.constant 0 : i32
    return %arg0, %c0_i32 : i32, i32
  }
  func.func @transform_1(%arg0: i32) -> (i32, i32, i32) {
    %c0_i32 = arith.constant 0 : i32
    %c0_i32_0 = arith.constant 0 : i32
    %c0_i32_1 = arith.constant 0 : i32
    return %arg0, %c0_i32, %c0_i32_0 : i32, i32, i32
  }
  func.func @transform_2(%arg0: i32) -> (i32, i32) {
    %c0_i32 = arith.constant 0 : i32
    %c0_i32_0 = arith.constant 0 : i32
    return %arg0, %c0_i32 : i32, i32
  }
  func.func @transform_3(%arg0: i32) -> (i32, i32) {
    %c0_i32 = arith.constant 0 : i32
    %c0_i32_0 = arith.constant 0 : i32
    %c0_i32_1 = arith.constant 0 : i32
    return %c0_i32, %c0_i32_0 : i32, i32
  }
  func.func @transform_4(%arg0: i32) -> (i32, i32) {
    %c0_i32 = arith.constant 0 : i32
    %c0_i32_0 = arith.constant 0 : i32
    %c0_i32_1 = arith.constant 0 : i32
    return %c0_i32, %c0_i32_0 : i32, i32
  }
  func.func @transform_5(%arg0: i32) -> (i32, i32) {
    %c0_i32 = arith.constant 0 : i32
    %c0_i32_0 = arith.constant 0 : i32
    %c0_i32_1 = arith.constant 0 : i32
    return %c0_i32, %c0_i32_0 : i32, i32
  }
  func.func @transform_6(%arg0: i32) -> (i32, i32) {
    %c0_i32 = arith.constant 0 : i32
    %c0_i32_0 = arith.constant 0 : i32
    %c0_i32_1 = arith.constant 0 : i32
    return %c0_i32, %c0_i32_0 : i32, i32
  }
  func.func @transform_7(%arg0: i32) -> (i32, i32) {
    %c0_i32 = arith.constant 0 : i32
    %c0_i32_0 = arith.constant 0 : i32
    %c0_i32_1 = arith.constant 0 : i32
    return %c0_i32, %c0_i32_0 : i32, i32
  }
  func.func @transform_8(%arg0: i32) -> (i32, i32) {
    %c0_i32 = arith.constant 0 : i32
    %c0_i32_0 = arith.constant 0 : i32
    return %arg0, %c0_i32 : i32, i32
  }
}

</mosaic_0001>

<llo_original>
// kernel: tpu_custom_call.1
$region0: #{tpu_custom_call.1}
  #allocation0 [shape = 'u32[]', space=smem, size = 0x4, offset = 0x4, fixed_abs, tag = 'smem constant byte address 0x4 - core index']
  #allocation1 [shape = 'u32[144,128]{1,0:T(1,128)}', space=vmem, size = 0x12000, scoped, tag = 'internal scratch']
  #allocation2 [shape = 'f32[1,1]{1,0:T(1,128)S(1)}', space=vmem, size = 0x200, scoped, tag = 'scoped memory for tpu_custom_call.1']
  %s0 = inlined_call_operand.vmem [shape: f32[2,4], index: 0, kind: input, shape index: {}]
  %s1 = inlined_call_operand.vmem [shape: f32[2,8,4], index: 1, kind: input, shape index: {}]
  %s2 = inlined_call_operand.vmem [shape: f32[2,8], index: 2, kind: input, shape index: {}]
  %s3 = inlined_call_operand.vmem [shape: f32[4,64], index: 3, kind: input, shape index: {}]
  %s4 = inlined_call_operand.vmem [shape: f32[8,64], index: 4, kind: input, shape index: {}]
  %s5 = inlined_call_operand.vmem [shape: f32[1,64], index: 5, kind: input, shape index: {}]
  %s6 = inlined_call_operand.vmem [shape: f32[1,64], index: 6, kind: input, shape index: {}]
  %s7 = inlined_call_operand.<no memory space> [shape: f32[1,1], index: 7, kind: input, shape index: {}]
  %s8 = inlined_call_operand.hbm [shape: f32[2,4], index: 8, kind: output, shape index: {}]
  %s9 = sld [smem:[#allocation0]]
  $region42: #{tpu_custom_call.1} parent=0
    _
  %s11 = ssub.s32 1, %s9
  %s12 = scalar_select 0, %s11, %s9
  %v13 = vstv %s7
  %14 = vst [vmem:[#allocation2] sm:$0x1] %v13
  $region1: #{tpu_custom_call.1} parent=0
    #allocation3 [shape = 'u8[1024]{0}', space=vmem, size = 0x400, scoped, tag = 'output window, operand 0, single buffered']
    #allocation4 [shape = 's32[1]{0}', space=sflag, size = 0x4, scoped, tag = 'scoped memory for tpu_custom_call.1']
    %15 = vsyncpa [#allocation4], 0
    // Predicated region
    $region2: #{tpu_custom_call.1} parent=1 // pred_check
      _
    $region3: #{tpu_custom_call.1} parent=1 // pred_check_branch
      %17 = sbr.rel (0) target = $region5
    $region4: #{tpu_custom_call.1} parent=1 // pred_region
      _
    $region5: #{tpu_custom_call.1} parent=1 // pred_fallthru
      _
    // Predicated region
    $region6: #{tpu_custom_call.1} parent=1 // pred_check
      _
    $region7: #{tpu_custom_call.1} parent=1 // pred_check_branch
      %19 = sbr.rel (0) target = $region9
    $region8: #{tpu_custom_call.1} parent=1 // pred_region
      _
    $region9: #{tpu_custom_call.1} parent=1 // pred_fallthru
      _
    // Predicated region
    $region10: #{tpu_custom_call.1} parent=1 // pred_check
      _
    $region11: #{tpu_custom_call.1} parent=1 // pred_check_branch
      %21 = sbr.rel (0) target = $region13
    $region12: #{tpu_custom_call.1} parent=1 // pred_region
      _
    $region13: #{tpu_custom_call.1} parent=1 // pred_fallthru
      _
    // Predicated region
    $region14: #{tpu_custom_call.1} parent=1 // pred_check
      _
    $region15: #{tpu_custom_call.1} parent=1 // pred_check_branch
      %23 = sbr.rel (0) target = $region17
    $region16: #{tpu_custom_call.1} parent=1 // pred_region
      _
    $region17: #{tpu_custom_call.1} parent=1 // pred_fallthru
      _
    // Predicated region
    $region18: #{tpu_custom_call.1} parent=1 // pred_check
      _
    $region19: #{tpu_custom_call.1} parent=1 // pred_check_branch
      %25 = sbr.rel (0) target = $region21
    $region20: #{tpu_custom_call.1} parent=1 // pred_region
      _
    $region21: #{tpu_custom_call.1} parent=1 // pred_fallthru
      _
    // Predicated region
    $region22: #{tpu_custom_call.1} parent=1 // pred_check
      _
    $region23: #{tpu_custom_call.1} parent=1 // pred_check_branch
      %27 = sbr.rel (0) target = $region25
    $region24: #{tpu_custom_call.1} parent=1 // pred_region
      _
    $region25: #{tpu_custom_call.1} parent=1 // pred_fallthru
      _
    // Predicated region
    $region26: #{tpu_custom_call.1} parent=1 // pred_check
      _
    $region27: #{tpu_custom_call.1} parent=1 // pred_check_branch
      %29 = sbr.rel (0) target = $region29
    $region28: #{tpu_custom_call.1} parent=1 // pred_region
      _
    $region29: #{tpu_custom_call.1} parent=1 // pred_fallthru
      _
    // Predicated region
    $region30: #{tpu_custom_call.1} parent=1 // pred_check
      _
    $region31: #{tpu_custom_call.1} parent=1 // pred_check_branch
      %31 = sbr.rel (0) target = $region33
    $region32: #{tpu_custom_call.1} parent=1 // pred_region
      _
    $region33: #{tpu_custom_call.1} parent=1 // pred_fallthru
      _
    %v32 = vld [vmem:[%s0] sm:$0x3]
    %v33 = vld [vmem:[%s1] sm:$0xff]
    %v34 = vld [vmem:[%s1 + $0x8] sm:$0xff]
    %v35 = vld [vmem:[%s3] sm:$0xf]
    %v36 = vld [vmem:[%s5] sm:$0x1]
    %v38 = vlaneseq
    %v39 = vshrl.u32 %v38, 7
    %v40 = vsub.s32 0, %v39
    %v41 = vrot.slane %v36, %v40
    %vm43 = vcmask 31744
    %v45 = vsel %vm43, %v32, 0
    %vm47 = vcmask 1043456
    %v49 = vsel %vm47, %v35, 0
    %51 = vmatprep.subr.mxu0 0.0
    %52 = vmatpush1.msra.mxu0 0.0
    %53 = vmatprep.subr.mxu0 0.0
    %54 = vmatpush1.msra.mxu0 0.0
    %55 = vmatprep.subr.mxu0 0.0
    %56 = vmatpush1.msra.mxu0 0.0
    %57 = vmatprep.subr.mxu0 0.0
    %58 = vmatpush1.msra.mxu0 0.0
    %59 = vmatprep.subr.mxu0 0.0
    %60 = vmatpush1.msra.mxu0 0.0
    %61 = vmatprep.subr.mxu0 0.0
    %62 = vmatpush1.msra.mxu0 0.0
    %63 = vmatprep.subr.mxu0 0.0
    %64 = vmatpush1.msra.mxu0 0.0
    %65 = vmatprep.subr.mxu0 0.0
    %66 = vmatpush1.msra.mxu0 0.0
    %67 = vmatprep.subr.mxu0 0.0
    %68 = vmatpush1.msra.mxu0 0.0
    %69 = vmatprep.subr.mxu0 0.0
    %70 = vmatpush1.msra.mxu0 0.0
    %71 = vmatprep.subr.mxu0 0.0
    %72 = vmatpush1.msra.mxu0 0.0
    %73 = vmatprep.subr.mxu0 0.0
    %74 = vmatpush1.msra.mxu0 0.0
    %75 = vmatprep.subr.mxu0 0.0
    %76 = vmatpush1.msra.mxu0 0.0
    %77 = vmatprep.subr.mxu0 0.0
    %78 = vmatpush1.msra.mxu0 0.0
    %79 = vmatprep.subr.mxu0 0.0
    %80 = vmatpush1.msra.mxu0 0.0
    %81 = vmatprep.subr.mxu0 0.0
    %82 = vmatpush1.msra.mxu0 %v49
    %83 = vmatprep.subr.mxu0 0.0
    %84 = vmatpush2.msra.mxu0 0.0
    %85 = vmatprep.subr.mxu0 0.0
    %86 = vmatpush2.msra.mxu0 0.0
    %87 = vmatprep.subr.mxu0 0.0
    %88 = vmatpush2.msra.mxu0 0.0
    %89 = vmatprep.subr.mxu0 0.0
    %90 = vmatpush2.msra.mxu0 0.0
    %91 = vmatprep.subr.mxu0 0.0
    %92 = vmatpush2.msra.mxu0 0.0
    %93 = vmatprep.subr.mxu0 0.0
    %94 = vmatpush2.msra.mxu0 0.0
    %95 = vmatprep.subr.mxu0 0.0
    %96 = vmatpush2.msra.mxu0 0.0
    %97 = vmatprep.subr.mxu0 0.0
    %98 = vmatpush2.msra.mxu0 0.0
    %99 = vmatprep.subr.mxu0 0.0
    %100 = vmatpush2.msra.mxu0 0.0
    %101 = vmatprep.subr.mxu0 0.0
    %102 = vmatpush2.msra.mxu0 0.0
    %103 = vmatprep.subr.mxu0 0.0
    %104 = vmatpush2.msra.mxu0 0.0
    %105 = vmatprep.subr.mxu0 0.0
    %106 = vmatpush2.msra.mxu0 0.0
    %107 = vmatprep.subr.mxu0 0.0
    %108 = vmatpush2.msra.mxu0 0.0
    %109 = vmatprep.subr.mxu0 0.0
    %110 = vmatpush2.msra.mxu0 0.0
    %111 = vmatprep.subr.mxu0 0.0
    %112 = vmatpush2.msra.mxu0 0.0
    %113 = vmatprep.subr.mxu0 0.0
    %114 = vmatpush2.msra.mxu0 0.0
    %115 = vmatprep.mubr.f32.mxu0 0.0
    %116 = vmatmul.mubr.f32.gmra.mxu0 %v45
    %v117 = vpop.f32.mrf.mxu0
    %v118 = vadd.f32 %v41, %v117
    %v119 = vpop.f32.mrf.mxu0
    %120 = vdwg.mxu0
    %v122 = vunpack.c.l.s4 1966171168
    %v123 = vunpack.c.0.s8 %v122
    %v124 = vlaneseq
    %v125 = vshrl.u32 %v124, 7
    %v126 = vsub.s32 %v123, %v125
    %v127 = vrot.slane %v32, %v126
    %v128 = vcombine.high %v127, %v127
    %v130 = vunpack.c.l.s4 1966171168
    %v131 = vunpack.c.0.s8 %v130
    %v132 = vlaneseq
    %v133 = vshrl.u32 %v132, 7
    %v134 = vsub.s32 %v131, %v133
    %v135 = vrot.slane %v127, %v134
    %v137 = vunpack.c.l.s4 1966171168
    %v138 = vunpack.c.0.s8 %v137
    %v139 = vlaneseq
    %v140 = vshrl.u32 %v139, 7
    %v141 = vsub.s32 %v138, %v140
    %v142 = vrot.slane %v128, %v141
    %v143 = vlaneseq
    %v144 = vshrl.u32 %v143, 7
    %v145 = vsub.s32 0, %v144
    %v146 = vrot.slane %v135, %v145
    %v147 = vlaneseq
    %v148 = vshrl.u32 %v147, 7
    %v149 = vsub.s32 0, %v148
    %v150 = vrot.slane %v142, %v149
    %v153 = vmul.f32 %v146, %v33
    %v154 = vmul.f32 %v150, %v34
    %157 = vrot.lane.b32.xlu0 %v153, 4
    %v158 = vpop.permute.xlu0 %157
    %159 = vrot.lane.b32.xlu0 %v154, 4
    %v160 = vpop.permute.xlu0 %159
    %v163 = vsel %vm43, %v33, %v158
    %v164 = vsel %vm43, %v34, %v160
    %v165 = vld [vmem:[%s4] sm:$0xff]
    %vm166 = vcmask 64512
    %v168 = vsel %vm166, %v163, 0
    %v171 = vsel %vm166, %v164, 0
    %173 = vmatprep.subr.mxu0 0.0
    %174 = vmatpush1.msra.mxu0 0.0
    %175 = vmatprep.subr.mxu0 0.0
    %176 = vmatpush1.msra.mxu0 0.0
    %177 = vmatprep.subr.mxu0 0.0
    %178 = vmatpush1.msra.mxu0 0.0
    %179 = vmatprep.subr.mxu0 0.0
    %180 = vmatpush1.msra.mxu0 0.0
    %181 = vmatprep.subr.mxu0 0.0
    %182 = vmatpush1.msra.mxu0 0.0
    %183 = vmatprep.subr.mxu0 0.0
    %184 = vmatpush1.msra.mxu0 0.0
    %185 = vmatprep.subr.mxu0 0.0
    %186 = vmatpush1.msra.mxu0 0.0
    %187 = vmatprep.subr.mxu0 0.0
    %188 = vmatpush1.msra.mxu0 0.0
    %189 = vmatprep.subr.mxu0 0.0
    %190 = vmatpush1.msra.mxu0 0.0
    %191 = vmatprep.subr.mxu0 0.0
    %192 = vmatpush1.msra.mxu0 0.0
    %193 = vmatprep.subr.mxu0 0.0
    %194 = vmatpush1.msra.mxu0 0.0
    %195 = vmatprep.subr.mxu0 0.0
    %196 = vmatpush1.msra.mxu0 0.0
    %197 = vmatprep.subr.mxu0 0.0
    %198 = vmatpush1.msra.mxu0 0.0
    %199 = vmatprep.subr.mxu0 0.0
    %200 = vmatpush1.msra.mxu0 0.0
    %201 = vmatprep.subr.mxu0 0.0
    %202 = vmatpush1.msra.mxu0 0.0
    %203 = vmatprep.subr.mxu0 0.0
    %204 = vmatpush1.msra.mxu0 %v165
    %205 = vmatprep.subr.mxu0 0.0
    %206 = vmatpush2.msra.mxu0 0.0
    %207 = vmatprep.subr.mxu0 0.0
    %208 = vmatpush2.msra.mxu0 0.0
    %209 = vmatprep.subr.mxu0 0.0
    %210 = vmatpush2.msra.mxu0 0.0
    %211 = vmatprep.subr.mxu0 0.0
    %212 = vmatpush2.msra.mxu0 0.0
    %213 = vmatprep.subr.mxu0 0.0
    %214 = vmatpush2.msra.mxu0 0.0
    %215 = vmatprep.subr.mxu0 0.0
    %216 = vmatpush2.msra.mxu0 0.0
    %217 = vmatprep.subr.mxu0 0.0
    %218 = vmatpush2.msra.mxu0 0.0
    %219 = vmatprep.subr.mxu0 0.0
    %220 = vmatpush2.msra.mxu0 0.0
    %221 = vmatprep.subr.mxu0 0.0
    %222 = vmatpush2.msra.mxu0 0.0
    %223 = vmatprep.subr.mxu0 0.0
    %224 = vmatpush2.msra.mxu0 0.0
    %225 = vmatprep.subr.mxu0 0.0
    %226 = vmatpush2.msra.mxu0 0.0
    %227 = vmatprep.subr.mxu0 0.0
    %228 = vmatpush2.msra.mxu0 0.0
    %229 = vmatprep.subr.mxu0 0.0
    %230 = vmatpush2.msra.mxu0 0.0
    %231 = vmatprep.subr.mxu0 0.0
    %232 = vmatpush2.msra.mxu0 0.0
    %233 = vmatprep.subr.mxu0 0.0
    %234 = vmatpush2.msra.mxu0 0.0
    %235 = vmatprep.subr.mxu0 0.0
    %236 = vmatpush2.msra.mxu0 0.0
    %237 = vmatprep.mubr.f32.mxu0 0.0
    %238 = vmatmul.mubr.f32.gmra.mxu0 %v168
    %v239 = vpop.f32.mrf.mxu0
    %v240 = vadd.f32 0.0, %v239
    %v241 = vpop.f32.mrf.mxu0
    %242 = vmatprep.mubr.f32.mxu0 0.0
    %243 = vmatmul.mubr.f32.gmra.mxu0 %v171
    %v244 = vpop.f32.mrf.mxu0
    %v245 = vadd.f32 0.0, %v244
    %v246 = vpop.f32.mrf.mxu0
    %247 = vdwg.mxu0
    %v250 = vunpack.c.l.s4 1966171168
    %v251 = vunpack.c.0.s8 %v250
    %v252 = vlaneseq
    %v253 = vshrl.u32 %v252, 7
    %v254 = vsub.s32 %v251, %v253
    %v255 = vrot.slane %v118, %v254
    %v256 = vcombine.high %v255, %v255
    %v258 = vunpack.c.l.s4 1966171168
    %v259 = vunpack.c.0.s8 %v258
    %v260 = vlaneseq
    %v261 = vshrl.u32 %v260, 7
    %v262 = vsub.s32 %v259, %v261
    %v263 = vrot.slane %v255, %v262
    %v265 = vunpack.c.l.s4 1966171168
    %v266 = vunpack.c.0.s8 %v265
    %v267 = vlaneseq
    %v268 = vshrl.u32 %v267, 7
    %v269 = vsub.s32 %v266, %v268
    %v270 = vrot.slane %v256, %v269
    %v271 = vlaneseq
    %v272 = vshrl.u32 %v271, 7
    %v273 = vsub.s32 0, %v272
    %v274 = vrot.slane %v263, %v273
    %v275 = vlaneseq
    %v276 = vshrl.u32 %v275, 7
    %v277 = vsub.s32 0, %v276
    %v278 = vrot.slane %v270, %v277
    %v281 = vadd.f32 %v274, %v240
    %v282 = vadd.f32 %v278, %v245
    %v283 = vmax.f32 %v281, 0.0
    %v284 = vmax.f32 %v282, 0.0
    %v285 = vld [vmem:[%s6] sm:$0x1]
    %v287 = vlaneseq
    %v288 = vshrl.u32 %v287, 7
    %v289 = vsub.s32 0, %v288
    %v290 = vrot.slane %v285, %v289
    %v292 = vmul.f32 %v283, %v290
    %v293 = vmul.f32 %v284, %v290
    %vm294 = vcmask 523264
    %v295 = vsel %vm294, %v292, 0.0
    %296 = vadd.xlane.f32.xlu0 %v295
    %v297 = vpop.xlane.xlu0 %296
    %v298 = vsel %vm294, %v293, 0.0
    %299 = vadd.xlane.f32.xlu0 %v298
    %v300 = vpop.xlane.xlu0 %299
    %v301 = vld [vmem:[#allocation2] sm:$0x1]
    %v303 = vlaneseq
    %v304 = vshrl.u32 %v303, 7
    %v305 = vsub.s32 0, %v304
    %v306 = vrot.slane %v301, %v305
    %v308 = vadd.f32 %v297, %v306
    %v309 = vadd.f32 %v300, %v306
    %v310 = vld [vmem:[%s2] sm:$0x3]
    %v311 = vlaneseq
    %v312 = vshrl.u32 %v311, 7
    %v313 = vsub.s32 0, %v312
    %v314 = vrot.slane %v310, %v313
    %316 = vbcast.lane.b32.xlu0 %v314, 256
    %v317 = vpop.permute.xlu0 %316
    %v318 = vlaneseq
    %v319 = vshrl.u32 %v318, 7
    %v320 = vsub.s32 1, %v319
    %v321 = vrot.slane %v310, %v320
    %323 = vbcast.lane.b32.xlu0 %v321, 256
    %v324 = vpop.permute.xlu0 %323
    %v325 = vmul.f32 %v308, %v317
    %v326 = vmul.f32 %v309, %v324
    %328 = vset.pattern.permute.xlu0 0
    %329 = vperm.xlu0 %328, %v325
    %v330 = vpop.permute.xlu0 %329
    %333 = vset.pattern.permute.xlu0 0
    %334 = vperm.xlu0 %333, %v326
    %v335 = vpop.permute.xlu0 %334
    %v337 = vmul.f32 %v330, %v33
    %v338 = vmul.f32 %v335, %v34
    %v339 = vsel %vm43, %v337, 0.0
    %v340 = vrot.slane %v339, 4
    %v341 = vadd.f32 %v339, %v340
    %v342 = vrot.slane %v341, 2
    %v343 = vadd.f32 %v341, %v342
    %v344 = vrot.slane %v343, 1
    %v345 = vadd.f32 %v343, %v344
    %v346 = vsel %vm43, %v338, 0.0
    %v347 = vrot.slane %v346, 4
    %v348 = vadd.f32 %v346, %v347
    %v349 = vrot.slane %v348, 2
    %v350 = vadd.f32 %v348, %v349
    %v351 = vrot.slane %v350, 1
    %v352 = vadd.f32 %v350, %v351
    %vm355 = vcmask 1041409
    %v356 = vsel %vm355, %v352, %v345
    %vm358 = vcmask 25600
    %359 = vst.msk [vmem:[#allocation3] sm:$0x3] %vm358, %v356
    // Predicated region
    $region34: #{tpu_custom_call.1} parent=1 // pred_check
      _
    $region35: #{tpu_custom_call.1} parent=1 // pred_check_branch
      %361 = sbr.rel (0) target = $region37
    $region36: #{tpu_custom_call.1} parent=1 // pred_region
      %s363 = ssub.s32 32, 32
      %364 = vsyncadd [#allocation4], %s363
      %s366 = sshll.u32 [#allocation3], 4
      %s367 = int_to_ptr.vmem [resolvable:$true] %s366
      %369 = dma.vmem_to_hbm [thread:$0]  %s367, 32, %s8, [#allocation4]
    $region37: #{tpu_custom_call.1} parent=1 // pred_fallthru
      _
    // Predicated region
    $region38: #{tpu_custom_call.1} parent=1 // pred_check
      _
    $region39: #{tpu_custom_call.1} parent=1 // pred_check_branch
      %371 = sbr.rel (0) target = $region41
    $region40: #{tpu_custom_call.1} parent=1 // pred_region
      %372 = dma.done [#allocation4], 32
    $region41: #{tpu_custom_call.1} parent=1 // pred_fallthru
      _
    %373 = vsyncpa [#allocation4], 1

</llo_original>
